<compile_context>
chip_gen: v7x
topology: tpu7x:2x2x1
jax: 0.10.0
libtpu: 0.0.40
codegen_flags: <defaults>
</compile_context>

<pallas_src>
import functools

import numpy as np
import jax
import jax.numpy as jnp
from jax.experimental import pallas as pl
from jax.experimental.pallas import tpu as pltpu


# ----------------------------------------------------------------------------
# Pallas kernel
# ----------------------------------------------------------------------------
def _snakebeta_kernel(x_ref, a_ref, b_ref, o_ref, *, logscale):
    """x:[TM,TN] rows=(b,c) flattened, lanes=T.  a,b:[TM,1] per-row params."""
    x = x_ref[...].astype(jnp.float32)
    a = a_ref[...]                      # [TM, 1] f32
    b = b_ref[...]                      # [TM, 1] f32
    if logscale:
        a = jnp.exp(a)                  # EUP
        b = jnp.exp(b)
    s = jnp.sin(x * a)                  # lane-broadcast mul (VPU) + sin (EUP)
    inv_b = 1.0 / (b + 1e-9)            # per-row reciprocal, [TM, 1]
    o_ref[...] = (x + inv_b * (s * s)).astype(o_ref.dtype)


def _pick_tile(n, pref, align):
    """Largest multiple of `align` that divides n and is <= pref; else full n."""
    if n % align != 0:
        return n
    t = min(pref, n)
    t -= t % align
    while t > 0 and n % t != 0:
        t -= align
    return t if t > 0 else n


def snake_beta(x, alpha, beta, *, alpha_logscale=False):
    """x: [B, C, T] float; alpha, beta: [C] per-channel parameters."""
    B, C, T = x.shape
    rows = B * C
    x2 = x.reshape(rows, T)                                   # contiguous, no copy

    # Per-row (batch-tiled) parameter columns, [rows, 1] (tiny).
    a_rows = jnp.broadcast_to(
        alpha.astype(jnp.float32)[None, :], (B, C)).reshape(rows, 1)
    b_rows = jnp.broadcast_to(
        beta.astype(jnp.float32)[None, :], (B, C)).reshape(rows, 1)

    # ~1 MiB f32 blocks: 256 rows x 1024 lanes when the shape allows it.
    tm = _pick_tile(rows, 256, 8)        # sublane tile (multiple of 8 or full)
    tn = _pick_tile(T, 1024, 128)        # lane tile (multiple of 128 or full)
    grid = (rows // tm, T // tn)

    out = pl.pallas_call(
        functools.partial(_snakebeta_kernel, logscale=alpha_logscale),
        out_shape=jax.ShapeDtypeStruct((rows, T), x.dtype),
        grid=grid,
        in_specs=[
            pl.BlockSpec((tm, tn), lambda i, j: (i, j)),
            pl.BlockSpec((tm, 1), lambda i, j: (i, 0)),
            pl.BlockSpec((tm, 1), lambda i, j: (i, 0)),
        ],
        out_specs=pl.BlockSpec((tm, tn), lambda i, j: (i, j)),
        compiler_params=pltpu.CompilerParams(
            dimension_semantics=("parallel", "parallel"),
            vmem_limit_bytes=64 << 20),
    )(x2, a_rows, b_rows)
    return out.reshape(B, C, T)


# ----------------------------------------------------------------------------
# Pure-JAX reference (mirrors the PyTorch forward exactly)
# ----------------------------------------------------------------------------
def snake_beta_ref(x, alpha, beta, alpha_logscale=False):
    a = alpha[None, :, None]
    b = beta[None, :, None]
    if alpha_logscale:
        a = jnp.exp(a)
        b = jnp.exp(b)
    return x + 1.0 / (b + 1e-9) * jnp.sin(x * a) ** 2


# ----------------------------------------------------------------------------
if __name__ == "__main__":
    key = jax.random.PRNGKey(0)
    kx, ka, kb, kx2, ka2, kb2 = jax.random.split(key, 6)

    # --- small-shape case (B=2, C=4, T=16): single full-array block ---------
    B, C, T = 2, 4, 16
    x = jax.random.normal(kx, (B, C, T), jnp.float32)
    alpha = 1.0 + 0.1 * jax.random.normal(ka, (C,), jnp.float32)
    beta = 1.0 + 0.1 * jax.random.normal(kb, (C,), jnp.float32)

    fwd = jax.jit(functools.partial(snake_beta, alpha_logscale=False))
    y = jax.block_until_ready(fwd(x, alpha, beta))
    y_ref = snake_beta_ref(x, alpha, beta, alpha_logscale=False)
    assert y.shape == (B, C, T)
    np.testing.assert_allclose(np.asarray(y), np.asarray(y_ref),
                               rtol=1e-5, atol=1e-5)

    # --- alpha_logscale=True path -------------------------------------------
    fwd_log = jax.jit(functools.partial(snake_beta, alpha_logscale=True))
    alpha0 = jnp.zeros((C,), jnp.float32)     # SnakeBeta(logscale) init: zeros
    beta0 = jnp.zeros((C,), jnp.float32)
    y_log = jax.block_until_ready(fwd_log(x, alpha0, beta0))
    y_log_ref = snake_beta_ref(x, alpha0, beta0, alpha_logscale=True)
    np.testing.assert_allclose(np.asarray(y_log), np.asarray(y_log_ref),
                               rtol=1e-5, atol=1e-5)

    # --- larger tiled case (exercises the 2-D parallel grid) ----------------
    B2, C2, T2 = 2, 256, 2048                 # rows=512 -> tm=256, tn=1024, grid (2,2)
    x_big = jax.random.normal(kx2, (B2, C2, T2), jnp.float32)
    alpha_big = 1.0 + 0.1 * jax.random.normal(ka2, (C2,), jnp.float32)
    beta_big = 1.0 + 0.1 * jax.random.normal(kb2, (C2,), jnp.float32)
    y_big = jax.block_until_ready(fwd(x_big, alpha_big, beta_big))
    y_big_ref = snake_beta_ref(x_big, alpha_big, beta_big)
    np.testing.assert_allclose(np.asarray(y_big), np.asarray(y_big_ref),
                               rtol=1e-5, atol=1e-5)

    # --- bf16 input path ------------------------------------------------------
    x_bf = x_big.astype(jnp.bfloat16)
    y_bf = jax.block_until_ready(fwd(x_bf, alpha_big, beta_big))
    y_bf_ref = snake_beta_ref(x_bf.astype(jnp.float32), alpha_big, beta_big)
    np.testing.assert_allclose(np.asarray(y_bf, dtype=np.float32),
                               np.asarray(y_bf_ref), rtol=2e-2, atol=2e-2)

    print("KERNEL_OK")
</pallas_src>

<mosaic_0001>
module attributes {stable_mosaic.version = 11 : i64} {
  func.func @_snakebeta_kernel(%arg0: i32, %arg1: i32, %arg2: memref<8x16xf32, #tpu.memory_space<vmem>>, %arg3: memref<8x1xf32, #tpu.memory_space<vmem>>, %arg4: memref<8x1xf32, #tpu.memory_space<vmem>>, %arg5: memref<8x16xf32, #tpu.memory_space<vmem>>) attributes {dimension_semantics = [#tpu.dimension_semantics<parallel>, #tpu.dimension_semantics<parallel>], iteration_bounds = array<i64: 1, 1>, scalar_prefetch = 0 : i64, scratch_operands = 0 : i64, tpu.core_type = #tpu.core_type<tc>, window_params = [{transform_indices = @transform_0, window_bounds = array<i64: 8, 16>}, {transform_indices = @transform_1, window_bounds = array<i64: 8, 1>}, {transform_indices = @transform_2, window_bounds = array<i64: 8, 1>}, {transform_indices = @transform_3, window_bounds = array<i64: 8, 16>}]} {
    %c0 = arith.constant 0 : index
    %c0_0 = arith.constant 0 : index
    %0 = vector.load %arg2[%c0, %c0_0] : memref<8x16xf32, #tpu.memory_space<vmem>>, vector<8x16xf32>
    %c0_1 = arith.constant 0 : index
    %c0_2 = arith.constant 0 : index
    %1 = vector.load %arg3[%c0_1, %c0_2] : memref<8x1xf32, #tpu.memory_space<vmem>>, vector<8x1xf32>
    %c0_3 = arith.constant 0 : index
    %c0_4 = arith.constant 0 : index
    %2 = vector.load %arg4[%c0_3, %c0_4] : memref<8x1xf32, #tpu.memory_space<vmem>>, vector<8x1xf32>
    %3 = vector.broadcast %1 : vector<8x1xf32> to vector<8x16xf32>
    %4 = arith.mulf %0, %3 : vector<8x16xf32>
    %5 = math.sin %4 : vector<8x16xf32>
    %cst = arith.constant 9.99999971E-10 : f32
    %6 = vector.broadcast %cst : f32 to vector<8x1xf32>
    %7 = arith.addf %2, %6 : vector<8x1xf32>
    %cst_5 = arith.constant 1.000000e+00 : f32
    %8 = vector.broadcast %cst_5 : f32 to vector<8x1xf32>
    %9 = arith.divf %8, %7 : vector<8x1xf32>
    %10 = arith.mulf %5, %5 : vector<8x16xf32>
    %11 = vector.broadcast %9 : vector<8x1xf32> to vector<8x16xf32>
    %12 = arith.mulf %11, %10 : vector<8x16xf32>
    %13 = arith.addf %0, %12 : vector<8x16xf32>
    %c0_6 = arith.constant 0 : index
    %c0_7 = arith.constant 0 : index
    %14 = vector.load %arg5[%c0_6, %c0_7] : memref<8x16xf32, #tpu.memory_space<vmem>>, vector<8x16xf32>
    tpu.vector_store %arg5[%c0_6, %c0_7], %13 {strides = array<i32>} : memref<8x16xf32, #tpu.memory_space<vmem>>, vector<8x16xf32>,
    return
  }
  func.func @transform_0(%arg0: i32, %arg1: i32) -> (i32, i32) {
    %c0_i32 = arith.constant 0 : i32
    return %arg0, %arg1 : i32, i32
  }
  func.func @transform_1(%arg0: i32, %arg1: i32) -> (i32, i32) {
    %c0_i32 = arith.constant 0 : i32
    %c0_i32_0 = arith.constant 0 : i32
    return %arg0, %c0_i32 : i32, i32
  }
  func.func @transform_2(%arg0: i32, %arg1: i32) -> (i32, i32) {
    %c0_i32 = arith.constant 0 : i32
    %c0_i32_0 = arith.constant 0 : i32
    return %arg0, %c0_i32 : i32, i32
  }
  func.func @transform_3(%arg0: i32, %arg1: i32) -> (i32, i32) {
    %c0_i32 = arith.constant 0 : i32
    return %arg0, %arg1 : i32, i32
  }
}

</mosaic_0001>

<llo_original>
// kernel: snake_beta.1
$region0: #{snake_beta.1}
  #allocation0 [shape = 'u32[]', space=smem, size = 0x4, offset = 0x4, fixed_abs, tag = 'smem constant byte address 0x4 - core index']
  #allocation1 [shape = 'u32[144,128]{1,0:T(1,128)}', space=vmem, size = 0x12000, scoped, tag = 'internal scratch']
  %s0 = inlined_call_operand.hbm [shape: f32[8,16], index: 0, kind: input, shape index: {}]
  %s1 = inlined_call_operand.hbm [shape: f32[8,1], index: 1, kind: input, shape index: {}]
  %s2 = inlined_call_operand.hbm [shape: f32[8,1], index: 2, kind: input, shape index: {}]
  %s3 = inlined_call_operand.hbm [shape: f32[8,16], index: 3, kind: output, shape index: {}]
  %s4 = sld [smem:[#allocation0]]
  $region34: #{snake_beta.1} parent=0
    _
  %s6 = ssub.s32 1, %s4
  %s7 = scalar_select 0, %s6, %s4
  $region1: #{snake_beta.1} parent=0
    #allocation2 [shape = 'u8[4096]{0}', space=vmem, size = 0x1000, scoped, tag = 'input window, operand 0, single buffered']
    #allocation3 [shape = 's32[1]{0}', space=sflag, size = 0x4, scoped, tag = 'scoped memory for snake_beta.1']
    #allocation4 [shape = 's32[1]{0}', space=sflag, size = 0x4, scoped, tag = 'scoped memory for snake_beta.1']
    #allocation5 [shape = 'u8[4096]{0}', space=vmem, size = 0x1000, scoped, tag = 'input window, operand 1, single buffered']
    #allocation6 [shape = 's32[1]{0}', space=sflag, size = 0x4, scoped, tag = 'scoped memory for snake_beta.1']
    #allocation7 [shape = 'u8[4096]{0}', space=vmem, size = 0x1000, scoped, tag = 'input window, operand 2, single buffered']
    #allocation8 [shape = 'u8[4096]{0}', space=vmem, size = 0x1000, scoped, tag = 'output window, operand 0, single buffered']
    %8 = vsyncpa [#allocation3], 0
    %9 = vsyncpa [#allocation6], 0
    %10 = vsyncpa [#allocation4], 0
    // Predicated region
    $region2: #{snake_beta.1} parent=1 // pred_check
      _
    $region3: #{snake_beta.1} parent=1 // pred_check_branch
      %12 = sbr.rel (0) target = $region5
    $region4: #{snake_beta.1} parent=1 // pred_region
      %s14 = ssub.s32 128, 128
      %15 = vsyncadd [#allocation3], %s14
      %s17 = sshll.u32 [#allocation2], 4
      %s18 = int_to_ptr.vmem [resolvable:$true] %s17
      %20 = dma.hbm_to_vmem [thread:$0]  %s0, 128, %s18, [#allocation3]
    $region5: #{snake_beta.1} parent=1 // pred_fallthru
      _
    // Predicated region
    $region6: #{snake_beta.1} parent=1 // pred_check
      _
    $region7: #{snake_beta.1} parent=1 // pred_check_branch
      %22 = sbr.rel (0) target = $region9
    $region8: #{snake_beta.1} parent=1 // pred_region
      %s24 = ssub.s32 128, 128
      %25 = vsyncadd [#allocation6], %s24
      %s27 = sshll.u32 [#allocation5], 4
      %s28 = int_to_ptr.vmem [resolvable:$true] %s27
      %30 = dma.hbm_to_vmem [thread:$0]  %s1, 128, %s28, [#allocation6]
    $region9: #{snake_beta.1} parent=1 // pred_fallthru
      _
    // Predicated region
    $region10: #{snake_beta.1} parent=1 // pred_check
      _
    $region11: #{snake_beta.1} parent=1 // pred_check_branch
      %32 = sbr.rel (0) target = $region13
    $region12: #{snake_beta.1} parent=1 // pred_region
      %s34 = ssub.s32 128, 128
      %35 = vsyncadd [#allocation6], %s34
      %s37 = sshll.u32 [#allocation7], 4
      %s38 = int_to_ptr.vmem [resolvable:$true] %s37
      %40 = dma.hbm_to_vmem [thread:$0]  %s2, 128, %s38, [#allocation6]
    $region13: #{snake_beta.1} parent=1 // pred_fallthru
      _
    // Predicated region
    $region14: #{snake_beta.1} parent=1 // pred_check
      _
    $region15: #{snake_beta.1} parent=1 // pred_check_branch
      %42 = sbr.rel (0) target = $region17
    $region16: #{snake_beta.1} parent=1 // pred_region
      %43 = dma.done [#allocation3], 128
    $region17: #{snake_beta.1} parent=1 // pred_fallthru
      _
    // Predicated region
    $region18: #{snake_beta.1} parent=1 // pred_check
      _
    $region19: #{snake_beta.1} parent=1 // pred_check_branch
      %45 = sbr.rel (0) target = $region21
    $region20: #{snake_beta.1} parent=1 // pred_region
      %46 = dma.done [#allocation6], 128
    $region21: #{snake_beta.1} parent=1 // pred_fallthru
      _
    // Predicated region
    $region22: #{snake_beta.1} parent=1 // pred_check
      _
    $region23: #{snake_beta.1} parent=1 // pred_check_branch
      %48 = sbr.rel (0) target = $region25
    $region24: #{snake_beta.1} parent=1 // pred_region
      %49 = dma.done [#allocation6], 128
    $region25: #{snake_beta.1} parent=1 // pred_fallthru
      _
    %v50 = vld [vmem:[#allocation2] sm:$0xff]
    %v51 = vld [vmem:[#allocation5] sm:$0xff]
    %v52 = vld [vmem:[#allocation7] sm:$0xff]
    %54 = vset.pattern.permute.xlu0 0
    %55 = vperm.xlu0 %54, %v51
    %v56 = vpop.permute.xlu0 %55
    %v58 = vmul.f32 %v50, %v56
    %v59 = vand.u32 2147483647, %v58
    %vm60 = vcmp.le.f32.partialorder %v59, 0.7853982
    %vm61 = vcmp.lt.s32.totalorder %v58, 0
    %v62 = vand.u32 %v58, 2139095040
    %v63 = vshrl.u32 %v62, 23
    %v64 = vsub.s32 %v63, 127
    %v65 = vand.u32 2147483647, %v58
    %v66 = vand.u32 %v65, 8388607
    %v67 = vor.u32 %v66, 8388608
    %v68 = vsub.s32 0, %v67
    %v69 = vadd.s32 %v64, 1
    %vm70 = vcmp.gt.s32.totalorder %v69, 0
    %v71 = vsel %vm70, %v69, 0
    %v72 = vshrl.u32 %v71, 5
    %v73 = vand.u32 %v71, 31
    %v74 = vsub.s32 32, %v73
    %v75 = vshrl.u32 683565275, %v74
    %v76 = vshll.u32 683565275, %v73
    %v77 = vshrl.u32 2475754826, %v74
    %v78 = vor.u32 %v76, %v77
    %v79 = vshll.u32 2475754826, %v73
    %v80 = vshrl.u32 2131351028, %v74
    %v81 = vor.u32 %v79, %v80
    %v82 = vshll.u32 2131351028, %v73
    %v83 = vshrl.u32 2102212464, %v74
    %v84 = vor.u32 %v82, %v83
    %v85 = vshll.u32 2102212464, %v73
    %v86 = vshrl.u32 920167782, %v74
    %v87 = vor.u32 %v85, %v86
    %v88 = vshll.u32 920167782, %v73
    %v89 = vshrl.u32 1326507024, %v74
    %v90 = vor.u32 %v88, %v89
    %vm91 = vcmp.lt.s32.totalorder %v72, 1
    %vm92 = vcmp.lt.s32.totalorder %v72, 2
    %vm93 = vcmp.lt.s32.totalorder %v72, 3
    %vm94 = vcmp.lt.s32.totalorder %v72, 4
    %v95 = vsel %vm91, %v75, %v78
    %v96 = vsel %vm94, %v84, 2102212464
    %v97 = vsel %vm93, %v81, %v96
    %v98 = vsel %vm92, %v95, %v97
    %v99 = vsel %vm91, %v78, %v81
    %v100 = vsel %vm94, %v87, 920167782
    %v101 = vsel %vm93, %v84, %v100
    %v102 = vsel %vm92, %v99, %v101
    %v103 = vsel %vm91, %v81, %v84
    %v104 = vsel %vm94, %v90, 1326507024
    %v105 = vsel %vm93, %v87, %v104
    %v106 = vsel %vm92, %v103, %v105
    %v107 = vshll.u32 %v67, 8
    %v108 = vmul.u32.u64.compose %v107, %v106
    %v109 = vextract.low.u32 %v108
    %v110 = vextract.high.u32 %v108
    %v111 = vmul.u32.u64.compose %v107, %v102
    %v112 = vextract.low.u32 %v111
    %v113 = vextract.high.u32 %v111
    %v114 = vmul.u32 %v107, %v98
    %v115 = vadd.s32 %v110, %v112
    %vm116 = vc.u32 %v110, %v112
    %v117 = vadd.s32 %v113, 1
    %v118 = vsel %vm116, %v117, %v113
    %v119 = vadd.s32 %v114, %v118
    %v120 = vadd.s32 %v119, 536870912
    %v121 = vshrl.u32 %v120, 30
    %v122 = vshll.u32 %v121, 30
    %v123 = vsub.s32 %v119, %v122
    %vm124 = vcmp.lt.s32.totalorder %v123, 0
    %v125 = vsub.s32 0, %v123
    %v126 = vsel %vm124, %v125, %v123
    %v127 = vclz %v126
    %v128 = vsub.s32 %v127, 2
    %vm129 = vcmp.gt.s32.totalorder 0, %v128
    %v130 = vsel %vm129, 0, %v128
    %v131 = vsub.s32 32, %v130
    %v132 = vshll.u32 %v123, %v130
    %v133 = vshrl.u32 %v115, %v131
    %v134 = vor.u32 %v132, %v133
    %v135 = vsub.s32 4294967266, %v130
    %v136 = vadd.s32 %v135, 127
    %v137 = vshll.u32 %v136, 23
    %v138 = vor.u32 4788187, %v137
    %v139 = vand.u32 2147483647, %v138
    %v141 = vcvt.s32.f32 %v134
    %v142 = vmul.f32 %v141, %v139
    %v143 = vxor.u32 %v142, 2147483648
    %v144 = vsel %vm61, %v143, %v142
    %v145 = vsub.s32 4, %v121
    %v146 = vsel %vm61, %v145, %v121
    %v147 = vsel %vm60, %v58, %v144
    %v148 = vsel %vm60, 0, %v146
    %v149 = vcosq.f32.pop %v147
    %v150 = vsinq.f32.pop %v147
    %vm151 = vweird.f32 %v58
    %v152 = vadd.s32 %v148, 3
    %v153 = vand.u32 %v152, 3
    %vm154 = vcmp.lt.s32.totalorder %v153, 2
    %vm155 = vcmp.eq.s32.totalorder %v153, 0
    %v156 = vxor.u32 %v150, 2147483648
    %v157 = vsel %vm155, %v149, %v156
    %vm158 = vcmp.eq.s32.totalorder %v153, 2
    %v159 = vxor.u32 %v149, 2147483648
    %v160 = vsel %vm158, %v159, %v150
    %v161 = vsel %vm154, %v157, %v160
    %v162 = vsel %vm151, nan, %v161
    %v163 = vadd.f32 %v52, 1e-09
    %v164 = vrcp.pop %v163
    %v165 = vmul.f32 1.0, %v164
    %v166 = vmul.f32 %v162, %v162
    %168 = vset.pattern.permute.xlu0 0
    %169 = vperm.xlu0 %168, %v165
    %v170 = vpop.permute.xlu0 %169
    %v172 = vmul.f32 %v170, %v166
    %v173 = vadd.f32 %v50, %v172
    %vm174 = vcmask 130048
    %175 = vst.msk [vmem:[#allocation8] sm:$0xff] %vm174, %v173
    // Predicated region
    $region26: #{snake_beta.1} parent=1 // pred_check
      _
    $region27: #{snake_beta.1} parent=1 // pred_check_branch
      %177 = sbr.rel (0) target = $region29
    $region28: #{snake_beta.1} parent=1 // pred_region
      %s179 = ssub.s32 128, 128
      %180 = vsyncadd [#allocation4], %s179
      %s182 = sshll.u32 [#allocation8], 4
      %s183 = int_to_ptr.vmem [resolvable:$true] %s182
      %185 = dma.vmem_to_hbm [thread:$0]  %s183, 128, %s3, [#allocation4]
    $region29: #{snake_beta.1} parent=1 // pred_fallthru
      _
    // Predicated region
    $region30: #{snake_beta.1} parent=1 // pred_check
      _
    $region31: #{snake_beta.1} parent=1 // pred_check_branch
      %187 = sbr.rel (0) target = $region33
    $region32: #{snake_beta.1} parent=1 // pred_region
      %188 = dma.done [#allocation4], 128
    $region33: #{snake_beta.1} parent=1 // pred_fallthru
      _
    %189 = vsyncpa [#allocation3], 1
    %190 = vsyncpa [#allocation6], 1
    %191 = vsyncpa [#allocation4], 1

</llo_original>
